<compile_context>
chip_gen: v7x
topology: tpu7x:2x2x1
jax: 0.10.0
libtpu: 0.0.40
codegen_flags: <defaults>
</compile_context>

<pallas_src>
import functools

import jax
import jax.numpy as jnp
from jax import lax
from jax.experimental import pallas as pl
from jax.experimental.pallas import tpu as pltpu

HIDDEN = 128


def _gnn_kernel(minprob, maxprob,
                x_ref, adj_ref, noise_ref,
                wr1_ref, wo1_ref, br1_ref,
                w2_ref, br2_ref,
                w3_ref, br3_ref,
                wf_ref, bf_ref,
                u_ref, p_ref):
    x = x_ref[...]          # (BN, 1)   stacked scalar node features (batch-major rows)
    adj_n = adj_ref[...]    # (BN, BN)  block-diagonal, row-normalized adjacency
    noise = noise_ref[...]  # (1, BN)   uniform(0,1) samples, lane-dense

    # --- DenseSAGEConv 1 (in=1 -> 128) + ReLU ---------------------------------
    # lin_rel / lin_root degenerate to per-channel scalings of the scalar feature:
    # adj_n @ (x * wr1) == (adj_n @ x) * wr1, avoiding a degenerate (BN,BN)@(BN,1).
    xr = x * wr1_ref[...]                                   # (BN, 128)
    xo = x * wo1_ref[...]                                   # (BN, 128)
    agg = jnp.dot(adj_n, xr, preferred_element_type=jnp.float32)
    h = jnp.maximum(agg + br1_ref[...] + xo, 0.0)           # (BN, 128)

    # --- DenseSAGEConv 2 (128 -> 128) + ReLU: fused [agg|h] @ [wr2;wo2] -------
    agg = jnp.dot(adj_n, h, preferred_element_type=jnp.float32)
    cat = jnp.concatenate([agg, h], axis=-1)                # (BN, 256)
    h = jnp.maximum(
        jnp.dot(cat, w2_ref[...], preferred_element_type=jnp.float32) + br2_ref[...],
        0.0)

    # --- DenseSAGEConv 3 (128 -> 128) + ReLU: fused ---------------------------
    agg = jnp.dot(adj_n, h, preferred_element_type=jnp.float32)
    cat = jnp.concatenate([agg, h], axis=-1)                # (BN, 256)
    h = jnp.maximum(
        jnp.dot(cat, w3_ref[...], preferred_element_type=jnp.float32) + br3_ref[...],
        0.0)

    # --- fc1 (128 -> 1) + sigmoid + rescale, lane-dense (1, BN) ---------------
    # (1,128) x (BN,128) contracted over channels -> (1, BN): unmasked lane layout.
    logit = lax.dot_general(wf_ref[...], h, (((1,), (1,)), ((), ())),
                            preferred_element_type=jnp.float32) + bf_ref[...]
    p = jax.nn.sigmoid(logit) * (maxprob - minprob) + minprob

    # Bernoulli(p): threshold externally supplied uniforms.
    u_ref[...] = (noise < p).astype(jnp.float32)
    p_ref[...] = p


def gnn_forward(hs, adj, noise, params, minprob, maxprob):
    """hs: (B, N) float32, adj: (N, N) float32, noise: (B, N, 1) uniform(0,1)."""
    B, N = hs.shape
    BN = B * N

    x_col = hs.reshape(BN, 1).astype(jnp.float32)
    noise_lane = noise.reshape(1, BN).astype(jnp.float32)

    # Hoisted adjacency normalization (shared across batch) + block-diag stacking.
    adj = adj.astype(jnp.float32)
    deg = jnp.sum(adj, axis=-1, keepdims=True)
    adj_n = adj / jnp.maximum(deg, 1.0)
    adj_bd = jnp.kron(jnp.eye(B, dtype=jnp.float32), adj_n)        # (BN, BN)

    wr1, wo1, br1, wr2, wo2, br2, wr3, wo3, br3, wf, bf = params
    w2 = jnp.concatenate([wr2, wo2], axis=0)                       # (256, 128)
    w3 = jnp.concatenate([wr3, wo3], axis=0)                       # (256, 128)

    def full(shape):   # whole-array block (single grid step)
        return pl.BlockSpec(shape, lambda i: (0,) * len(shape))

    in_arrays = (x_col, adj_bd, noise_lane,
                 wr1, wo1, br1, w2, br2, w3, br3, wf, bf)
    in_specs = [full(a.shape) for a in in_arrays]
    out_specs = (full((1, BN)), full((1, BN)))
    out_shape = (jax.ShapeDtypeStruct((1, BN), jnp.float32),
                 jax.ShapeDtypeStruct((1, BN), jnp.float32))

    kernel = functools.partial(_gnn_kernel, float(minprob), float(maxprob))
    u_lane, p_lane = pl.pallas_call(
        kernel,
        grid=(1,),
        in_specs=in_specs,
        out_specs=out_specs,
        out_shape=out_shape,
        compiler_params=pltpu.CompilerParams(dimension_semantics=("arbitrary",)),
    )(*in_arrays)

    return u_lane.reshape(B, N, 1), p_lane.reshape(B, N, 1)


def gnn_reference(hs, adj, noise, params, minprob, maxprob):
    """Pure-JAX reference mirroring the PyTorch forward (for correctness check)."""
    wr1, wo1, br1, wr2, wo2, br2, wr3, wo3, br3, wf, bf = params
    x = hs[..., None].astype(jnp.float32)                 # (B, N, 1)
    deg = jnp.sum(adj, axis=-1, keepdims=True)
    adj_n = adj / jnp.maximum(deg, 1.0)
    # conv1 (in=1): lin_rel/lin_root are per-channel scalings
    agg = jnp.einsum('ij,bjc->bic', adj_n, x)
    h = jax.nn.relu(agg * wr1 + br1 + x * wo1)
    for wr, wo, br in ((wr2, wo2, br2), (wr3, wo3, br3)):
        agg = jnp.einsum('ij,bjc->bic', adj_n, h)
        h = jax.nn.relu(agg @ wr + br + h @ wo)
    logit = jnp.sum(h * wf, axis=-1, keepdims=True) + bf
    p = jax.nn.sigmoid(logit) * (maxprob - minprob) + minprob
    u = (noise < p).astype(jnp.float32)
    return u, p


if __name__ == "__main__":
    B, N = 2, 16
    minprob, maxprob = 0.1, 0.9

    key = jax.random.PRNGKey(0)
    k_adj, k_hs, k_noise, k_w = jax.random.split(key, 4)

    # Deterministic symmetric 0/1 adjacency with self-loops.
    a = (jax.random.uniform(k_adj, (N, N)) < 0.3).astype(jnp.float32)
    adj = jnp.maximum(jnp.maximum(a, a.T), jnp.eye(N, dtype=jnp.float32))

    hs = jax.random.normal(k_hs, (B, N), dtype=jnp.float32)

    # Uniform samples used for the Bernoulli draw (thresholded inside the kernel).
    # TODO(synk): torch.bernoulli's internal RNG has no direct equivalent; we use
    # externally supplied uniforms compared against p (same distribution).
    noise = jax.random.uniform(k_noise, (B, N, 1), dtype=jnp.float32)

    # Deterministic parameter init (shapes from Gnn.__init__ / DenseSAGEConv).
    ks = jax.random.split(k_w, 11)
    s = 0.3
    params = (
        jax.random.normal(ks[0], (1, HIDDEN), jnp.float32) * s,        # conv1 lin_rel W^T
        jax.random.normal(ks[1], (1, HIDDEN), jnp.float32) * s,        # conv1 lin_root W^T
        jax.random.normal(ks[2], (1, HIDDEN), jnp.float32) * 0.05,     # conv1 lin_rel b
        jax.random.normal(ks[3], (HIDDEN, HIDDEN), jnp.float32) * s / jnp.sqrt(HIDDEN),
        jax.random.normal(ks[4], (HIDDEN, HIDDEN), jnp.float32) * s / jnp.sqrt(HIDDEN),
        jax.random.normal(ks[5], (1, HIDDEN), jnp.float32) * 0.05,
        jax.random.normal(ks[6], (HIDDEN, HIDDEN), jnp.float32) * s / jnp.sqrt(HIDDEN),
        jax.random.normal(ks[7], (HIDDEN, HIDDEN), jnp.float32) * s / jnp.sqrt(HIDDEN),
        jax.random.normal(ks[8], (1, HIDDEN), jnp.float32) * 0.05,
        jax.random.normal(ks[9], (1, HIDDEN), jnp.float32) * s,        # fc1 weight (1, 128)
        jax.random.normal(ks[10], (1, 1), jnp.float32) * 0.05,         # fc1 bias
    )

    u, p = gnn_forward(hs, adj, noise, params, minprob, maxprob)
    u = jax.block_until_ready(u)
    p = jax.block_until_ready(p)

    u_ref, p_ref = gnn_reference(hs, adj, noise, params, minprob, maxprob)

    assert u.shape == (B, N, 1) and p.shape == (B, N, 1)
    assert jnp.all(p >= minprob) and jnp.all(p <= maxprob)
    assert jnp.allclose(p, p_ref, atol=1e-4, rtol=1e-4), "p mismatch vs reference"
    assert jnp.allclose(u, u_ref), "u mismatch vs reference"

    print("KERNEL_OK")
</pallas_src>

<mosaic_0001>
module attributes {stable_mosaic.version = 11 : i64} {
  func.func @_gnn_kernel(%arg0: i32, %arg1: memref<32x1xf32, #tpu.memory_space<vmem>>, %arg2: memref<32x32xf32, #tpu.memory_space<vmem>>, %arg3: memref<1x32xf32, #tpu.memory_space<vmem>>, %arg4: memref<1x128xf32, #tpu.memory_space<vmem>>, %arg5: memref<1x128xf32, #tpu.memory_space<vmem>>, %arg6: memref<1x128xf32, #tpu.memory_space<vmem>>, %arg7: memref<256x128xf32, #tpu.memory_space<vmem>>, %arg8: memref<1x128xf32, #tpu.memory_space<vmem>>, %arg9: memref<256x128xf32, #tpu.memory_space<vmem>>, %arg10: memref<1x128xf32, #tpu.memory_space<vmem>>, %arg11: memref<1x128xf32, #tpu.memory_space<vmem>>, %arg12: memref<1x1xf32, #tpu.memory_space<vmem>>, %arg13: memref<1x32xf32, #tpu.memory_space<vmem>>, %arg14: memref<1x32xf32, #tpu.memory_space<vmem>>) attributes {dimension_semantics = [#tpu.dimension_semantics<arbitrary>], iteration_bounds = array<i64: 1>, scalar_prefetch = 0 : i64, scratch_operands = 0 : i64, tpu.core_type = #tpu.core_type<tc>, window_params = [{pipeline_mode = #tpu.pipeline_mode<synchronous>, transform_indices = @transform_0, window_bounds = array<i64: 32, 1>}, {pipeline_mode = #tpu.pipeline_mode<synchronous>, transform_indices = @transform_1, window_bounds = array<i64: 32, 32>}, {pipeline_mode = #tpu.pipeline_mode<synchronous>, transform_indices = @transform_2, window_bounds = array<i64: 1, 32>}, {pipeline_mode = #tpu.pipeline_mode<synchronous>, transform_indices = @transform_3, window_bounds = array<i64: 1, 128>}, {pipeline_mode = #tpu.pipeline_mode<synchronous>, transform_indices = @transform_4, window_bounds = array<i64: 1, 128>}, {pipeline_mode = #tpu.pipeline_mode<synchronous>, transform_indices = @transform_5, window_bounds = array<i64: 1, 128>}, {pipeline_mode = #tpu.pipeline_mode<synchronous>, transform_indices = @transform_6, window_bounds = array<i64: 256, 128>}, {pipeline_mode = #tpu.pipeline_mode<synchronous>, transform_indices = @transform_7, window_bounds = array<i64: 1, 128>}, {pipeline_mode = #tpu.pipeline_mode<synchronous>, transform_indices = @transform_8, window_bounds = array<i64: 256, 128>}, {pipeline_mode = #tpu.pipeline_mode<synchronous>, transform_indices = @transform_9, window_bounds = array<i64: 1, 128>}, {pipeline_mode = #tpu.pipeline_mode<synchronous>, transform_indices = @transform_10, window_bounds = array<i64: 1, 128>}, {pipeline_mode = #tpu.pipeline_mode<synchronous>, transform_indices = @transform_11, window_bounds = array<i64: 1, 1>}, {pipeline_mode = #tpu.pipeline_mode<synchronous>, transform_indices = @transform_12, window_bounds = array<i64: 1, 32>}, {pipeline_mode = #tpu.pipeline_mode<synchronous>, transform_indices = @transform_13, window_bounds = array<i64: 1, 32>}]} {
    %c0 = arith.constant 0 : index
    %c0_0 = arith.constant 0 : index
    %0 = vector.load %arg1[%c0, %c0_0] : memref<32x1xf32, #tpu.memory_space<vmem>>, vector<32x1xf32>
    %c0_1 = arith.constant 0 : index
    %c0_2 = arith.constant 0 : index
    %1 = vector.load %arg2[%c0_1, %c0_2] : memref<32x32xf32, #tpu.memory_space<vmem>>, vector<32x32xf32>
    %c0_3 = arith.constant 0 : index
    %c0_4 = arith.constant 0 : index
    %2 = vector.load %arg3[%c0_3, %c0_4] : memref<1x32xf32, #tpu.memory_space<vmem>>, vector<1x32xf32>
    %c0_5 = arith.constant 0 : index
    %c0_6 = arith.constant 0 : index
    %3 = vector.load %arg4[%c0_5, %c0_6] : memref<1x128xf32, #tpu.memory_space<vmem>>, vector<1x128xf32>
    %4 = vector.broadcast %0 : vector<32x1xf32> to vector<32x128xf32>
    %5 = vector.broadcast %3 : vector<1x128xf32> to vector<32x128xf32>
    %6 = arith.mulf %4, %5 : vector<32x128xf32>
    %c0_7 = arith.constant 0 : index
    %c0_8 = arith.constant 0 : index
    %7 = vector.load %arg5[%c0_7, %c0_8] : memref<1x128xf32, #tpu.memory_space<vmem>>, vector<1x128xf32>
    %8 = vector.broadcast %0 : vector<32x1xf32> to vector<32x128xf32>
    %9 = vector.broadcast %7 : vector<1x128xf32> to vector<32x128xf32>
    %10 = arith.mulf %8, %9 : vector<32x128xf32>
    %cst = arith.constant dense<0.000000e+00> : vector<32x128xf32>
    %11 = tpu.matmul %1, %6, %cst {dimension_numbers = #tpu.dot_dimension_numbers<[1], [0], [0], [1], [0, 0, 1, 1], [], []>} : vector<32x32xf32>, vector<32x128xf32>, vector<32x128xf32> -> vector<32x128xf32>
    %c0_9 = arith.constant 0 : index
    %c0_10 = arith.constant 0 : index
    %12 = vector.load %arg6[%c0_9, %c0_10] : memref<1x128xf32, #tpu.memory_space<vmem>>, vector<1x128xf32>
    %13 = vector.broadcast %12 : vector<1x128xf32> to vector<32x128xf32>
    %14 = arith.addf %11, %13 : vector<32x128xf32>
    %15 = arith.addf %14, %10 : vector<32x128xf32>
    %cst_11 = arith.constant 0.000000e+00 : f32
    %16 = vector.broadcast %cst_11 : f32 to vector<32x128xf32>
    %17 = arith.maximumf %15, %16 : vector<32x128xf32>
    %cst_12 = arith.constant dense<0.000000e+00> : vector<32x128xf32>
    %18 = tpu.matmul %1, %17, %cst_12 {dimension_numbers = #tpu.dot_dimension_numbers<[1], [0], [0], [1], [0, 0, 1, 1], [], []>} : vector<32x32xf32>, vector<32x128xf32>, vector<32x128xf32> -> vector<32x128xf32>
    %19 = tpu.concatenate %18, %17 in 1 : vector<32x128xf32>, vector<32x128xf32> -> vector<32x256xf32>
    %c0_13 = arith.constant 0 : index
    %c0_14 = arith.constant 0 : index
    %20 = vector.load %arg7[%c0_13, %c0_14] : memref<256x128xf32, #tpu.memory_space<vmem>>, vector<256x128xf32>
    %cst_15 = arith.constant dense<0.000000e+00> : vector<32x128xf32>
    %21 = tpu.matmul %19, %20, %cst_15 {dimension_numbers = #tpu.dot_dimension_numbers<[1], [0], [0], [1], [0, 0, 1, 1], [], []>} : vector<32x256xf32>, vector<256x128xf32>, vector<32x128xf32> -> vector<32x128xf32>
    %c0_16 = arith.constant 0 : index
    %c0_17 = arith.constant 0 : index
    %22 = vector.load %arg8[%c0_16, %c0_17] : memref<1x128xf32, #tpu.memory_space<vmem>>, vector<1x128xf32>
    %23 = vector.broadcast %22 : vector<1x128xf32> to vector<32x128xf32>
    %24 = arith.addf %21, %23 : vector<32x128xf32>
    %cst_18 = arith.constant 0.000000e+00 : f32
    %25 = vector.broadcast %cst_18 : f32 to vector<32x128xf32>
    %26 = arith.maximumf %24, %25 : vector<32x128xf32>
    %cst_19 = arith.constant dense<0.000000e+00> : vector<32x128xf32>
    %27 = tpu.matmul %1, %26, %cst_19 {dimension_numbers = #tpu.dot_dimension_numbers<[1], [0], [0], [1], [0, 0, 1, 1], [], []>} : vector<32x32xf32>, vector<32x128xf32>, vector<32x128xf32> -> vector<32x128xf32>
    %28 = tpu.concatenate %27, %26 in 1 : vector<32x128xf32>, vector<32x128xf32> -> vector<32x256xf32>
    %c0_20 = arith.constant 0 : index
    %c0_21 = arith.constant 0 : index
    %29 = vector.load %arg9[%c0_20, %c0_21] : memref<256x128xf32, #tpu.memory_space<vmem>>, vector<256x128xf32>
    %cst_22 = arith.constant dense<0.000000e+00> : vector<32x128xf32>
    %30 = tpu.matmul %28, %29, %cst_22 {dimension_numbers = #tpu.dot_dimension_numbers<[1], [0], [0], [1], [0, 0, 1, 1], [], []>} : vector<32x256xf32>, vector<256x128xf32>, vector<32x128xf32> -> vector<32x128xf32>
    %c0_23 = arith.constant 0 : index
    %c0_24 = arith.constant 0 : index
    %31 = vector.load %arg10[%c0_23, %c0_24] : memref<1x128xf32, #tpu.memory_space<vmem>>, vector<1x128xf32>
    %32 = vector.broadcast %31 : vector<1x128xf32> to vector<32x128xf32>
    %33 = arith.addf %30, %32 : vector<32x128xf32>
    %cst_25 = arith.constant 0.000000e+00 : f32
    %34 = vector.broadcast %cst_25 : f32 to vector<32x128xf32>
    %35 = arith.maximumf %33, %34 : vector<32x128xf32>
    %c0_26 = arith.constant 0 : index
    %c0_27 = arith.constant 0 : index
    %36 = vector.load %arg11[%c0_26, %c0_27] : memref<1x128xf32, #tpu.memory_space<vmem>>, vector<1x128xf32>
    %cst_28 = arith.constant dense<0.000000e+00> : vector<1x32xf32>
    %37 = tpu.matmul %36, %35, %cst_28 {dimension_numbers = #tpu.dot_dimension_numbers<[1], [1], [0], [0], [0, 0, 1, 0], [], []>} : vector<1x128xf32>, vector<32x128xf32>, vector<1x32xf32> -> vector<1x32xf32>
    %c0_29 = arith.constant 0 : index
    %c0_30 = arith.constant 0 : index
    %38 = vector.load %arg12[%c0_29, %c0_30] : memref<1x1xf32, #tpu.memory_space<vmem>>, vector<1x1xf32>
    %39 = vector.broadcast %38 : vector<1x1xf32> to vector<1x32xf32>
    %40 = arith.addf %37, %39 : vector<1x32xf32>
    %41 = arith.negf %40 : vector<1x32xf32>
    %42 = math.exp %41 : vector<1x32xf32>
    %cst_31 = arith.constant 1.000000e+00 : f32
    %43 = vector.broadcast %cst_31 : f32 to vector<1x32xf32>
    %44 = arith.addf %43, %42 : vector<1x32xf32>
    %45 = arith.divf %43, %44 : vector<1x32xf32>
    %cst_32 = arith.constant 8.000000e-01 : f32
    %46 = vector.broadcast %cst_32 : f32 to vector<1x32xf32>
    %47 = arith.mulf %45, %46 : vector<1x32xf32>
    %cst_33 = arith.constant 1.000000e-01 : f32
    %48 = vector.broadcast %cst_33 : f32 to vector<1x32xf32>
    %49 = arith.addf %47, %48 : vector<1x32xf32>
    %50 = arith.cmpf olt, %2, %49 : vector<1x32xf32>
    %51 = arith.extui %50 : vector<1x32xi1> to vector<1x32xi32>
    %52 = arith.sitofp %51 : vector<1x32xi32> to vector<1x32xf32>
    %c0_34 = arith.constant 0 : index
    %c0_35 = arith.constant 0 : index
    %53 = vector.load %arg13[%c0_34, %c0_35] : memref<1x32xf32, #tpu.memory_space<vmem>>, vector<1x32xf32>
    tpu.vector_store %arg13[%c0_34, %c0_35], %52 {strides = array<i32>} : memref<1x32xf32, #tpu.memory_space<vmem>>, vector<1x32xf32>,
    %c0_36 = arith.constant 0 : index
    %c0_37 = arith.constant 0 : index
    %54 = vector.load %arg14[%c0_36, %c0_37] : memref<1x32xf32, #tpu.memory_space<vmem>>, vector<1x32xf32>
    tpu.vector_store %arg14[%c0_36, %c0_37], %49 {strides = array<i32>} : memref<1x32xf32, #tpu.memory_space<vmem>>, vector<1x32xf32>,
    return
  }
  func.func @transform_0(%arg0: i32) -> (i32, i32) {
    %c0_i32 = arith.constant 0 : i32
    %c0_i32_0 = arith.constant 0 : i32
    %c0_i32_1 = arith.constant 0 : i32
    return %c0_i32, %c0_i32_0 : i32, i32
  }
  func.func @transform_1(%arg0: i32) -> (i32, i32) {
    %c0_i32 = arith.constant 0 : i32
    %c0_i32_0 = arith.constant 0 : i32
    %c0_i32_1 = arith.constant 0 : i32
    return %c0_i32, %c0_i32_0 : i32, i32
  }
  func.func @transform_2(%arg0: i32) -> (i32, i32) {
    %c0_i32 = arith.constant 0 : i32
    %c0_i32_0 = arith.constant 0 : i32
    %c0_i32_1 = arith.constant 0 : i32
    return %c0_i32, %c0_i32_0 : i32, i32
  }
  func.func @transform_3(%arg0: i32) -> (i32, i32) {
    %c0_i32 = arith.constant 0 : i32
    %c0_i32_0 = arith.constant 0 : i32
    %c0_i32_1 = arith.constant 0 : i32
    return %c0_i32, %c0_i32_0 : i32, i32
  }
  func.func @transform_4(%arg0: i32) -> (i32, i32) {
    %c0_i32 = arith.constant 0 : i32
    %c0_i32_0 = arith.constant 0 : i32
    %c0_i32_1 = arith.constant 0 : i32
    return %c0_i32, %c0_i32_0 : i32, i32
  }
  func.func @transform_5(%arg0: i32) -> (i32, i32) {
    %c0_i32 = arith.constant 0 : i32
    %c0_i32_0 = arith.constant 0 : i32
    %c0_i32_1 = arith.constant 0 : i32
    return %c0_i32, %c0_i32_0 : i32, i32
  }
  func.func @transform_6(%arg0: i32) -> (i32, i32) {
    %c0_i32 = arith.constant 0 : i32
    %c0_i32_0 = arith.constant 0 : i32
    %c0_i32_1 = arith.constant 0 : i32
    return %c0_i32, %c0_i32_0 : i32, i32
  }
  func.func @transform_7(%arg0: i32) -> (i32, i32) {
    %c0_i32 = arith.constant 0 : i32
    %c0_i32_0 = arith.constant 0 : i32
    %c0_i32_1 = arith.constant 0 : i32
    return %c0_i32, %c0_i32_0 : i32, i32
  }
  func.func @transform_8(%arg0: i32) -> (i32, i32) {
    %c0_i32 = arith.constant 0 : i32
    %c0_i32_0 = arith.constant 0 : i32
    %c0_i32_1 = arith.constant 0 : i32
    return %c0_i32, %c0_i32_0 : i32, i32
  }
  func.func @transform_9(%arg0: i32) -> (i32, i32) {
    %c0_i32 = arith.constant 0 : i32
    %c0_i32_0 = arith.constant 0 : i32
    %c0_i32_1 = arith.constant 0 : i32
    return %c0_i32, %c0_i32_0 : i32, i32
  }
  func.func @transform_10(%arg0: i32) -> (i32, i32) {
    %c0_i32 = arith.constant 0 : i32
    %c0_i32_0 = arith.constant 0 : i32
    %c0_i32_1 = arith.constant 0 : i32
    return %c0_i32, %c0_i32_0 : i32, i32
  }
  func.func @transform_11(%arg0: i32) -> (i32, i32) {
    %c0_i32 = arith.constant 0 : i32
    %c0_i32_0 = arith.constant 0 : i32
    %c0_i32_1 = arith.constant 0 : i32
    return %c0_i32, %c0_i32_0 : i32, i32
  }
  func.func @transform_12(%arg0: i32) -> (i32, i32) {
    %c0_i32 = arith.constant 0 : i32
    %c0_i32_0 = arith.constant 0 : i32
    %c0_i32_1 = arith.constant 0 : i32
    return %c0_i32, %c0_i32_0 : i32, i32
  }
  func.func @transform_13(%arg0: i32) -> (i32, i32) {
    %c0_i32 = arith.constant 0 : i32
    %c0_i32_0 = arith.constant 0 : i32
    %c0_i32_1 = arith.constant 0 : i32
    return %c0_i32, %c0_i32_0 : i32, i32
  }
}

</mosaic_0001>

<llo_original>
// kernel: tpu_custom_call.1
$region0: #{tpu_custom_call.1}
  #allocation0 [shape = 'u32[]', space=smem, size = 0x4, offset = 0x4, fixed_abs, tag = 'smem constant byte address 0x4 - core index']
  #allocation1 [shape = 'u32[144,128]{1,0:T(1,128)}', space=vmem, size = 0x12000, scoped, tag = 'internal scratch']
  #allocation2 [shape = 'f32[1,1]{1,0:T(1,128)S(1)}', space=vmem, size = 0x200, scoped, tag = 'scoped memory for tpu_custom_call.1']
  %s0 = inlined_call_operand.vmem [shape: f32[32,1], index: 0, kind: input, shape index: {}]
  %s1 = inlined_call_operand.vmem [shape: f32[32,32], index: 1, kind: input, shape index: {}]
  %s2 = inlined_call_operand.vmem [shape: f32[1,32], index: 2, kind: input, shape index: {}]
  %s3 = inlined_call_operand.vmem [shape: f32[1,128], index: 3, kind: input, shape index: {}]
  %s4 = inlined_call_operand.vmem [shape: f32[1,128], index: 4, kind: input, shape index: {}]
  %s5 = inlined_call_operand.vmem [shape: f32[1,128], index: 5, kind: input, shape index: {}]
  %s6 = inlined_call_operand.hbm [shape: f32[256,128], index: 6, kind: input, shape index: {}]
  %s7 = inlined_call_operand.vmem [shape: f32[1,128], index: 7, kind: input, shape index: {}]
  %s8 = inlined_call_operand.hbm [shape: f32[256,128], index: 8, kind: input, shape index: {}]
  %s9 = inlined_call_operand.vmem [shape: f32[1,128], index: 9, kind: input, shape index: {}]
  %s10 = inlined_call_operand.vmem [shape: f32[1,128], index: 10, kind: input, shape index: {}]
  %s11 = inlined_call_operand.<no memory space> [shape: f32[1,1], index: 11, kind: input, shape index: {}]
  %s12 = inlined_call_operand.hbm [shape: f32[1,32], index: 12, kind: output, shape index: {0}]
  %s13 = inlined_call_operand.hbm [shape: f32[1,32], index: 13, kind: output, shape index: {1}]
  %14 = xla_tuple %s12, %s13
  %s15 = sld [smem:[#allocation0]]
  $region74: #{tpu_custom_call.1} parent=0
    _
  %s17 = ssub.s32 1, %s15
  %s18 = scalar_select 0, %s17, %s15
  %v19 = vstv %s11
  %20 = vst [vmem:[#allocation2] sm:$0x1] %v19
  $region1: #{tpu_custom_call.1} parent=0
    #allocation3 [shape = 'u8[131072]{0}', space=vmem, size = 0x20000, scoped, tag = 'input window, operand 6, single buffered']
    #allocation4 [shape = 's32[1]{0}', space=sflag, size = 0x4, scoped, tag = 'scoped memory for tpu_custom_call.1']
    #allocation5 [shape = 's32[1]{0}', space=sflag, size = 0x4, scoped, tag = 'scoped memory for tpu_custom_call.1']
    #allocation6 [shape = 'u8[131072]{0}', space=vmem, size = 0x20000, scoped, tag = 'input window, operand 8, single buffered']
    #allocation7 [shape = 's32[1]{0}', space=sflag, size = 0x4, scoped, tag = 'scoped memory for tpu_custom_call.1']
    #allocation8 [shape = 'u8[512]{0}', space=vmem, size = 0x400, scoped, tag = 'output window, operand 0, single buffered']
    #allocation9 [shape = 'u8[512]{0}', space=vmem, size = 0x400, scoped, tag = 'output window, operand 1, single buffered']
    #allocation10 [shape = 's32[1]{0}', space=sflag, size = 0x4, scoped, tag = 'scoped memory for tpu_custom_call.1']
    %21 = vsyncpa [#allocation4], 0
    %22 = vsyncpa [#allocation7], 0
    %23 = vsyncpa [#allocation5], 0
    %24 = vsyncpa [#allocation10], 0
    // Predicated region
    $region2: #{tpu_custom_call.1} parent=1 // pred_check
      _
    $region3: #{tpu_custom_call.1} parent=1 // pred_check_branch
      %26 = sbr.rel (0) target = $region5
    $region4: #{tpu_custom_call.1} parent=1 // pred_region
      _
    $region5: #{tpu_custom_call.1} parent=1 // pred_fallthru
      _
    // Predicated region
    $region6: #{tpu_custom_call.1} parent=1 // pred_check
      _
    $region7: #{tpu_custom_call.1} parent=1 // pred_check_branch
      %28 = sbr.rel (0) target = $region9
    $region8: #{tpu_custom_call.1} parent=1 // pred_region
      _
    $region9: #{tpu_custom_call.1} parent=1 // pred_fallthru
      _
    // Predicated region
    $region10: #{tpu_custom_call.1} parent=1 // pred_check
      _
    $region11: #{tpu_custom_call.1} parent=1 // pred_check_branch
      %30 = sbr.rel (0) target = $region13
    $region12: #{tpu_custom_call.1} parent=1 // pred_region
      _
    $region13: #{tpu_custom_call.1} parent=1 // pred_fallthru
      _
    // Predicated region
    $region14: #{tpu_custom_call.1} parent=1 // pred_check
      _
    $region15: #{tpu_custom_call.1} parent=1 // pred_check_branch
      %32 = sbr.rel (0) target = $region17
    $region16: #{tpu_custom_call.1} parent=1 // pred_region
      _
    $region17: #{tpu_custom_call.1} parent=1 // pred_fallthru
      _
    // Predicated region
    $region18: #{tpu_custom_call.1} parent=1 // pred_check
      _
    $region19: #{tpu_custom_call.1} parent=1 // pred_check_branch
      %34 = sbr.rel (0) target = $region21
    $region20: #{tpu_custom_call.1} parent=1 // pred_region
      _
    $region21: #{tpu_custom_call.1} parent=1 // pred_fallthru
      _
    // Predicated region
    $region22: #{tpu_custom_call.1} parent=1 // pred_check
      _
    $region23: #{tpu_custom_call.1} parent=1 // pred_check_branch
      %36 = sbr.rel (0) target = $region25
    $region24: #{tpu_custom_call.1} parent=1 // pred_region
      _
    $region25: #{tpu_custom_call.1} parent=1 // pred_fallthru
      _
    // Predicated region
    $region26: #{tpu_custom_call.1} parent=1 // pred_check
      _
    $region27: #{tpu_custom_call.1} parent=1 // pred_check_branch
      %38 = sbr.rel (0) target = $region29
    $region28: #{tpu_custom_call.1} parent=1 // pred_region
      %s40 = ssub.s32 4096, 4096
      %41 = vsyncadd [#allocation4], %s40
      %s42 = sshll.u32 [#allocation3], 4
      %s43 = int_to_ptr.vmem [resolvable:$true] %s42
      %48 = dma.hbm_to_vmem [thread:$0]  %s6, 4096, %s43, [#allocation4], 128, 128, 8
    $region29: #{tpu_custom_call.1} parent=1 // pred_fallthru
      _
    // Predicated region
    $region30: #{tpu_custom_call.1} parent=1 // pred_check
      _
    $region31: #{tpu_custom_call.1} parent=1 // pred_check_branch
      %50 = sbr.rel (0) target = $region33
    $region32: #{tpu_custom_call.1} parent=1 // pred_region
      _
    $region33: #{tpu_custom_call.1} parent=1 // pred_fallthru
      _
    // Predicated region
    $region34: #{tpu_custom_call.1} parent=1 // pred_check
      _
    $region35: #{tpu_custom_call.1} parent=1 // pred_check_branch
      %52 = sbr.rel (0) target = $region37
    $region36: #{tpu_custom_call.1} parent=1 // pred_region
      %s54 = ssub.s32 4096, 4096
      %55 = vsyncadd [#allocation7], %s54
      %s56 = sshll.u32 [#allocation6], 4
      %s57 = int_to_ptr.vmem [resolvable:$true] %s56
      %62 = dma.hbm_to_vmem [thread:$0]  %s8, 4096, %s57, [#allocation7], 128, 128, 8
    $region37: #{tpu_custom_call.1} parent=1 // pred_fallthru
      _
    // Predicated region
    $region38: #{tpu_custom_call.1} parent=1 // pred_check
      _
    $region39: #{tpu_custom_call.1} parent=1 // pred_check_branch
      %64 = sbr.rel (0) target = $region41
    $region40: #{tpu_custom_call.1} parent=1 // pred_region
      _
    $region41: #{tpu_custom_call.1} parent=1 // pred_fallthru
      _
    // Predicated region
    $region42: #{tpu_custom_call.1} parent=1 // pred_check
      _
    $region43: #{tpu_custom_call.1} parent=1 // pred_check_branch
      %66 = sbr.rel (0) target = $region45
    $region44: #{tpu_custom_call.1} parent=1 // pred_region
      _
    $region45: #{tpu_custom_call.1} parent=1 // pred_fallthru
      _
    // Predicated region
    $region46: #{tpu_custom_call.1} parent=1 // pred_check
      _
    $region47: #{tpu_custom_call.1} parent=1 // pred_check_branch
      %68 = sbr.rel (0) target = $region49
    $region48: #{tpu_custom_call.1} parent=1 // pred_region
      _
    $region49: #{tpu_custom_call.1} parent=1 // pred_fallthru
      _
    // Predicated region
    $region50: #{tpu_custom_call.1} parent=1 // pred_check
      _
    $region51: #{tpu_custom_call.1} parent=1 // pred_check_branch
      %70 = sbr.rel (0) target = $region53
    $region52: #{tpu_custom_call.1} parent=1 // pred_region
      %71 = dma.done [#allocation4], 4096
    $region53: #{tpu_custom_call.1} parent=1 // pred_fallthru
      _
    // Predicated region
    $region54: #{tpu_custom_call.1} parent=1 // pred_check
      _
    $region55: #{tpu_custom_call.1} parent=1 // pred_check_branch
      %73 = sbr.rel (0) target = $region57
    $region56: #{tpu_custom_call.1} parent=1 // pred_region
      %74 = dma.done [#allocation7], 4096
    $region57: #{tpu_custom_call.1} parent=1 // pred_fallthru
      _
    %v75 = vld [vmem:[%s0] sm:$0xff]
    %v76 = vld [vmem:[%s0 + $0x8] sm:$0xff]
    %v77 = vld [vmem:[%s0 + $0x10] sm:$0xff]
    %v78 = vld [vmem:[%s0 + $0x18] sm:$0xff]
    %v79 = vld [vmem:[%s1] sm:$0xff]
    %v80 = vld [vmem:[%s1 + $0x8] sm:$0xff]
    %v81 = vld [vmem:[%s1 + $0x10] sm:$0xff]
    %v82 = vld [vmem:[%s1 + $0x18] sm:$0xff]
    %v83 = vld [vmem:[%s2] sm:$0x1]
    %v84 = vld [vmem:[%s3] sm:$0x1]
    %86 = vset.pattern.permute.xlu0 0
    %87 = vperm.xlu0 %86, %v75
    %v88 = vpop.permute.xlu0 %87
    %91 = vset.pattern.permute.xlu0 0
    %92 = vperm.xlu0 %91, %v76
    %v93 = vpop.permute.xlu0 %92
    %96 = vset.pattern.permute.xlu0 0
    %97 = vperm.xlu0 %96, %v77
    %v98 = vpop.permute.xlu0 %97
    %101 = vset.pattern.permute.xlu0 0
    %102 = vperm.xlu0 %101, %v78
    %v103 = vpop.permute.xlu0 %102
    %v106 = vlaneseq
    %v107 = vshrl.u32 %v106, 7
    %v108 = vsub.s32 0, %v107
    %v109 = vrot.slane %v84, %v108
    %v111 = vmul.f32 %v88, %v109
    %v112 = vmul.f32 %v93, %v109
    %v113 = vmul.f32 %v98, %v109
    %v114 = vmul.f32 %v103, %v109
    %v115 = vld [vmem:[%s4] sm:$0x1]
    %v117 = vlaneseq
    %v118 = vshrl.u32 %v117, 7
    %v119 = vsub.s32 0, %v118
    %v120 = vrot.slane %v115, %v119
    %v122 = vmul.f32 %v88, %v120
    %v123 = vmul.f32 %v93, %v120
    %v124 = vmul.f32 %v98, %v120
    %v125 = vmul.f32 %v103, %v120
    %v126 = vld [vmem:[%s5] sm:$0x1]
    %v128 = vlaneseq
    %v129 = vshrl.u32 %v128, 7
    %v130 = vsub.s32 0, %v129
    %v131 = vrot.slane %v126, %v130
    %vm133 = vcmask 261120
    %v135 = vsel %vm133, %v79, 0
    %v138 = vsel %vm133, %v80, 0
    %v141 = vsel %vm133, %v81, 0
    %v144 = vsel %vm133, %v82, 0
    %146 = vmatprep.subr.mxu0 0.0
    %147 = vmatpush1.msra.mxu0 %v111
    %148 = vmatprep.subr.mxu0 0.0
    %149 = vmatpush1.msra.mxu0 %v112
    %150 = vmatprep.subr.mxu0 0.0
    %151 = vmatpush1.msra.mxu0 %v113
    %152 = vmatprep.subr.mxu0 0.0
    %153 = vmatpush1.msra.mxu0 %v114
    %154 = vmatprep.subr.mxu0 0.0
    %155 = vmatpush1.msra.mxu0 0.0
    %156 = vmatprep.subr.mxu0 0.0
    %157 = vmatpush1.msra.mxu0 0.0
    %158 = vmatprep.subr.mxu0 0.0
    %159 = vmatpush1.msra.mxu0 0.0
    %160 = vmatprep.subr.mxu0 0.0
    %161 = vmatpush1.msra.mxu0 0.0
    %162 = vmatprep.subr.mxu0 0.0
    %163 = vmatpush1.msra.mxu0 0.0
    %164 = vmatprep.subr.mxu0 0.0
    %165 = vmatpush1.msra.mxu0 0.0
    %166 = vmatprep.subr.mxu0 0.0
    %167 = vmatpush1.msra.mxu0 0.0
    %168 = vmatprep.subr.mxu0 0.0
    %169 = vmatpush1.msra.mxu0 0.0
    %170 = vmatprep.subr.mxu0 0.0
    %171 = vmatpush1.msra.mxu0 0.0
    %172 = vmatprep.subr.mxu0 0.0
    %173 = vmatpush1.msra.mxu0 0.0
    %174 = vmatprep.subr.mxu0 0.0
    %175 = vmatpush1.msra.mxu0 0.0
    %176 = vmatprep.subr.mxu0 0.0
    %177 = vmatpush1.msra.mxu0 0.0
    %178 = vmatprep.subr.mxu0 0.0
    %179 = vmatpush1.msra.mxu0 0.0
    %180 = vmatprep.subr.mxu0 0.0
    %181 = vmatpush1.msra.mxu0 0.0
    %182 = vmatprep.subr.mxu0 0.0
    %183 = vmatpush1.msra.mxu0 0.0
    %184 = vmatprep.subr.mxu0 0.0
    %185 = vmatpush1.msra.mxu0 0.0
    %186 = vmatprep.subr.mxu0 0.0
    %187 = vmatpush1.msra.mxu0 0.0
    %188 = vmatprep.subr.mxu0 0.0
    %189 = vmatpush1.msra.mxu0 0.0
    %190 = vmatprep.subr.mxu0 0.0
    %191 = vmatpush1.msra.mxu0 0.0
    %192 = vmatprep.subr.mxu0 0.0
    %193 = vmatpush1.msra.mxu0 0.0
    %194 = vmatprep.subr.mxu0 0.0
    %195 = vmatpush1.msra.mxu0 0.0
    %196 = vmatprep.subr.mxu0 0.0
    %197 = vmatpush1.msra.mxu0 0.0
    %198 = vmatprep.subr.mxu0 0.0
    %199 = vmatpush1.msra.mxu0 0.0
    %200 = vmatprep.subr.mxu0 0.0
    %201 = vmatpush1.msra.mxu0 0.0
    %202 = vmatprep.subr.mxu0 0.0
    %203 = vmatpush1.msra.mxu0 0.0
    %204 = vmatprep.subr.mxu0 0.0
    %205 = vmatpush1.msra.mxu0 0.0
    %206 = vmatprep.subr.mxu0 0.0
    %207 = vmatpush1.msra.mxu0 0.0
    %208 = vmatprep.subr.mxu0 0.0
    %209 = vmatpush1.msra.mxu0 0.0
    %210 = vmatprep.mubr.f32.mxu0 0.0
    %211 = vmatmul.mubr.f32.gmra.mrb[0].mxu0 %v135
    %v212 = vpop.f32.mrb[0].mxu0
    %v213 = vadd.f32 %v131, %v212
    %v214 = vpop.f32.mrb[0].mxu0
    %215 = vmatprep.mubr.f32.mxu0 0.0
    %216 = vmatmul.mubr.f32.gmra.mrb[0].mxu0 %v138
    %v217 = vpop.f32.mrb[0].mxu0
    %v218 = vadd.f32 %v131, %v217
    %v219 = vpop.f32.mrb[0].mxu0
    %220 = vmatprep.mubr.f32.mxu0 0.0
    %221 = vmatmul.mubr.f32.gmra.mrb[0].mxu0 %v141
    %v222 = vpop.f32.mrb[0].mxu0
    %v223 = vadd.f32 %v131, %v222
    %v224 = vpop.f32.mrb[0].mxu0
    %225 = vmatprep.mubr.f32.mxu0 0.0
    %226 = vmatmul.mubr.f32.gmra.mrb[0].mxu0 %v144
    %v227 = vpop.f32.mrb[0].mxu0
    %v228 = vadd.f32 %v131, %v227
    %v229 = vpop.f32.mrb[0].mxu0
    %230 = vdwg.mxu0
    %v231 = vadd.f32 %v213, %v122
    %v232 = vadd.f32 %v218, %v123
    %v233 = vadd.f32 %v223, %v124
    %v234 = vadd.f32 %v228, %v125
    %v235 = vmax.f32 %v231, 0.0
    %v236 = vmax.f32 %v232, 0.0
    %v237 = vmax.f32 %v233, 0.0
    %v238 = vmax.f32 %v234, 0.0
    %239 = vmatprep.subr.mxu0 0.0
    %240 = vmatpush1.msra.mxu0 %v235
    %241 = vmatprep.subr.mxu0 0.0
    %242 = vmatpush1.msra.mxu0 %v236
    %243 = vmatprep.subr.mxu0 0.0
    %244 = vmatpush1.msra.mxu0 %v237
    %245 = vmatprep.subr.mxu0 0.0
    %246 = vmatpush1.msra.mxu0 %v238
    %247 = vmatprep.subr.mxu0 0.0
    %248 = vmatpush1.msra.mxu0 0.0
    %249 = vmatprep.subr.mxu0 0.0
    %250 = vmatpush1.msra.mxu0 0.0
    %251 = vmatprep.subr.mxu0 0.0
    %252 = vmatpush1.msra.mxu0 0.0
    %253 = vmatprep.subr.mxu0 0.0
    %254 = vmatpush1.msra.mxu0 0.0
    %255 = vmatprep.subr.mxu0 0.0
    %256 = vmatpush1.msra.mxu0 0.0
    %257 = vmatprep.subr.mxu0 0.0
    %258 = vmatpush1.msra.mxu0 0.0
    %259 = vmatprep.subr.mxu0 0.0
    %260 = vmatpush1.msra.mxu0 0.0
    %261 = vmatprep.subr.mxu0 0.0
    %262 = vmatpush1.msra.mxu0 0.0
    %263 = vmatprep.subr.mxu0 0.0
    %264 = vmatpush1.msra.mxu0 0.0
    %265 = vmatprep.subr.mxu0 0.0
    %266 = vmatpush1.msra.mxu0 0.0
    %267 = vmatprep.subr.mxu0 0.0
    %268 = vmatpush1.msra.mxu0 0.0
    %269 = vmatprep.subr.mxu0 0.0
    %270 = vmatpush1.msra.mxu0 0.0
    %271 = vmatprep.subr.mxu0 0.0
    %272 = vmatpush1.msra.mxu0 0.0
    %273 = vmatprep.subr.mxu0 0.0
    %274 = vmatpush1.msra.mxu0 0.0
    %275 = vmatprep.subr.mxu0 0.0
    %276 = vmatpush1.msra.mxu0 0.0
    %277 = vmatprep.subr.mxu0 0.0
    %278 = vmatpush1.msra.mxu0 0.0
    %279 = vmatprep.subr.mxu0 0.0
    %280 = vmatpush1.msra.mxu0 0.0
    %281 = vmatprep.subr.mxu0 0.0
    %282 = vmatpush1.msra.mxu0 0.0
    %283 = vmatprep.subr.mxu0 0.0
    %284 = vmatpush1.msra.mxu0 0.0
    %285 = vmatprep.subr.mxu0 0.0
    %286 = vmatpush1.msra.mxu0 0.0
    %287 = vmatprep.subr.mxu0 0.0
    %288 = vmatpush1.msra.mxu0 0.0
    %289 = vmatprep.subr.mxu0 0.0
    %290 = vmatpush1.msra.mxu0 0.0
    %291 = vmatprep.subr.mxu0 0.0
    %292 = vmatpush1.msra.mxu0 0.0
    %293 = vmatprep.subr.mxu0 0.0
    %294 = vmatpush1.msra.mxu0 0.0
    %295 = vmatprep.subr.mxu0 0.0
    %296 = vmatpush1.msra.mxu0 0.0
    %297 = vmatprep.subr.mxu0 0.0
    %298 = vmatpush1.msra.mxu0 0.0
    %299 = vmatprep.subr.mxu0 0.0
    %300 = vmatpush1.msra.mxu0 0.0
    %301 = vmatprep.subr.mxu0 0.0
    %302 = vmatpush1.msra.mxu0 0.0
    %303 = vmatprep.mubr.f32.mxu0 0.0
    %304 = vmatmul.mubr.f32.gmra.mrb[0].mxu0 %v135
    %v305 = vpop.f32.mrb[0].mxu0
    %v306 = vadd.f32 0.0, %v305
    %v307 = vpop.f32.mrb[0].mxu0
    %308 = vmatprep.mubr.f32.mxu0 0.0
    %309 = vmatmul.mubr.f32.gmra.mrb[0].mxu0 %v138
    %v310 = vpop.f32.mrb[0].mxu0
    %v311 = vadd.f32 0.0, %v310
    %v312 = vpop.f32.mrb[0].mxu0
    %313 = vmatprep.mubr.f32.mxu0 0.0
    %314 = vmatmul.mubr.f32.gmra.mrb[0].mxu0 %v141
    %v315 = vpop.f32.mrb[0].mxu0
    %v316 = vadd.f32 0.0, %v315
    %v317 = vpop.f32.mrb[0].mxu0
    %318 = vmatprep.mubr.f32.mxu0 0.0
    %319 = vmatmul.mubr.f32.gmra.mrb[0].mxu0 %v144
    %v320 = vpop.f32.mrb[0].mxu0
    %v321 = vadd.f32 0.0, %v320
    %v322 = vpop.f32.mrb[0].mxu0
    %323 = vdwg.mxu0
    %v324 = vld [vmem:[#allocation3] sm:$0xff]
    %v325 = vld [vmem:[#allocation3 + $0x8] sm:$0xff]
    %v326 = vld [vmem:[#allocation3 + $0x10] sm:$0xff]
    %v327 = vld [vmem:[#allocation3 + $0x18] sm:$0xff]
    %v328 = vld [vmem:[#allocation3 + $0x20] sm:$0xff]
    %v329 = vld [vmem:[#allocation3 + $0x28] sm:$0xff]
    %v330 = vld [vmem:[#allocation3 + $0x30] sm:$0xff]
    %v331 = vld [vmem:[#allocation3 + $0x38] sm:$0xff]
    %v332 = vld [vmem:[#allocation3 + $0x40] sm:$0xff]
    %v333 = vld [vmem:[#allocation3 + $0x48] sm:$0xff]
    %v334 = vld [vmem:[#allocation3 + $0x50] sm:$0xff]
    %v335 = vld [vmem:[#allocation3 + $0x58] sm:$0xff]
    %v336 = vld [vmem:[#allocation3 + $0x60] sm:$0xff]
    %v337 = vld [vmem:[#allocation3 + $0x68] sm:$0xff]
    %v338 = vld [vmem:[#allocation3 + $0x70] sm:$0xff]
    %v339 = vld [vmem:[#allocation3 + $0x78] sm:$0xff]
    %v340 = vld [vmem:[#allocation3 + $0x80] sm:$0xff]
    %v341 = vld [vmem:[#allocation3 + $0x88] sm:$0xff]
    %v342 = vld [vmem:[#allocation3 + $0x90] sm:$0xff]
    %v343 = vld [vmem:[#allocation3 + $0x98] sm:$0xff]
    %v344 = vld [vmem:[#allocation3 + $0xa0] sm:$0xff]
    %v345 = vld [vmem:[#allocation3 + $0xa8] sm:$0xff]
    %v346 = vld [vmem:[#allocation3 + $0xb0] sm:$0xff]
    %v347 = vld [vmem:[#allocation3 + $0xb8] sm:$0xff]
    %v348 = vld [vmem:[#allocation3 + $0xc0] sm:$0xff]
    %v349 = vld [vmem:[#allocation3 + $0xc8] sm:$0xff]
    %v350 = vld [vmem:[#allocation3 + $0xd0] sm:$0xff]
    %v351 = vld [vmem:[#allocation3 + $0xd8] sm:$0xff]
    %v352 = vld [vmem:[#allocation3 + $0xe0] sm:$0xff]
    %v353 = vld [vmem:[#allocation3 + $0xe8] sm:$0xff]
    %v354 = vld [vmem:[#allocation3 + $0xf0] sm:$0xff]
    %v355 = vld [vmem:[#allocation3 + $0xf8] sm:$0xff]
    %v356 = vld [vmem:[%s7] sm:$0x1]
    %v358 = vlaneseq
    %v359 = vshrl.u32 %v358, 7
    %v360 = vsub.s32 0, %v359
    %v361 = vrot.slane %v356, %v360
    %363 = vmatprep.subr.mxu0 0.0
    %364 = vmatpush1.msra.mxu0 %v324
    %365 = vmatprep.subr.mxu0 0.0
    %366 = vmatpush1.msra.mxu0 %v325
    %367 = vmatprep.subr.mxu0 0.0
    %368 = vmatpush1.msra.mxu0 %v326
    %369 = vmatprep.subr.mxu0 0.0
    %370 = vmatpush1.msra.mxu0 %v327
    %371 = vmatprep.subr.mxu0 0.0
    %372 = vmatpush1.msra.mxu0 %v328
    %373 = vmatprep.subr.mxu0 0.0
    %374 = vmatpush1.msra.mxu0 %v329
    %375 = vmatprep.subr.mxu0 0.0
    %376 = vmatpush1.msra.mxu0 %v330
    %377 = vmatprep.subr.mxu0 0.0
    %378 = vmatpush1.msra.mxu0 %v331
    %379 = vmatprep.subr.mxu0 0.0
    %380 = vmatpush1.msra.mxu0 %v332
    %381 = vmatprep.subr.mxu0 0.0
    %382 = vmatpush1.msra.mxu0 %v333
    %383 = vmatprep.subr.mxu0 0.0
    %384 = vmatpush1.msra.mxu0 %v334
    %385 = vmatprep.subr.mxu0 0.0
    %386 = vmatpush1.msra.mxu0 %v335
    %387 = vmatprep.subr.mxu0 0.0
    %388 = vmatpush1.msra.mxu0 %v336
    %389 = vmatprep.subr.mxu0 0.0
    %390 = vmatpush1.msra.mxu0 %v337
    %391 = vmatprep.subr.mxu0 0.0
    %392 = vmatpush1.msra.mxu0 %v338
    %393 = vmatprep.subr.mxu0 0.0
    %394 = vmatpush1.msra.mxu0 %v339
    %395 = vmatprep.subr.mxu0 0.0
    %396 = vmatpush1.msra.mxu0 %v340
    %397 = vmatprep.subr.mxu0 0.0
    %398 = vmatpush1.msra.mxu0 %v341
    %399 = vmatprep.subr.mxu0 0.0
    %400 = vmatpush1.msra.mxu0 %v342
    %401 = vmatprep.subr.mxu0 0.0
    %402 = vmatpush1.msra.mxu0 %v343
    %403 = vmatprep.subr.mxu0 0.0
    %404 = vmatpush1.msra.mxu0 %v344
    %405 = vmatprep.subr.mxu0 0.0
    %406 = vmatpush1.msra.mxu0 %v345
    %407 = vmatprep.subr.mxu0 0.0
    %408 = vmatpush1.msra.mxu0 %v346
    %409 = vmatprep.subr.mxu0 0.0
    %410 = vmatpush1.msra.mxu0 %v347
    %411 = vmatprep.subr.mxu0 0.0
    %412 = vmatpush1.msra.mxu0 %v348
    %413 = vmatprep.subr.mxu0 0.0
    %414 = vmatpush1.msra.mxu0 %v349
    %415 = vmatprep.subr.mxu0 0.0
    %416 = vmatpush1.msra.mxu0 %v350
    %417 = vmatprep.subr.mxu0 0.0
    %418 = vmatpush1.msra.mxu0 %v351
    %419 = vmatprep.subr.mxu0 0.0
    %420 = vmatpush1.msra.mxu0 %v352
    %421 = vmatprep.subr.mxu0 0.0
    %422 = vmatpush1.msra.mxu0 %v353
    %423 = vmatprep.subr.mxu0 0.0
    %424 = vmatpush1.msra.mxu0 %v354
    %425 = vmatprep.subr.mxu0 0.0
    %426 = vmatpush1.msra.mxu0 %v355
    %427 = vmatprep.mubr.f32.mxu0 %v235
    %428 = vmatmul.mubr.f32.gmra.mrb[0].mxu0 %v306
    %v429 = vpop.f32.mrb[0].mxu0
    %v430 = vadd.f32 %v361, %v429
    %v431 = vpop.f32.mrb[0].mxu0
    %432 = vmatprep.mubr.f32.mxu0 %v236
    %433 = vmatmul.mubr.f32.gmra.mrb[0].mxu0 %v311
    %v434 = vpop.f32.mrb[0].mxu0
    %v435 = vadd.f32 %v361, %v434
    %v436 = vpop.f32.mrb[0].mxu0
    %437 = vmatprep.mubr.f32.mxu0 %v237
    %438 = vmatmul.mubr.f32.gmra.mrb[0].mxu0 %v316
    %v439 = vpop.f32.mrb[0].mxu0
    %v440 = vadd.f32 %v361, %v439
    %v441 = vpop.f32.mrb[0].mxu0
    %442 = vmatprep.mubr.f32.mxu0 %v238
    %443 = vmatmul.mubr.f32.gmra.mrb[0].mxu0 %v321
    %v444 = vpop.f32.mrb[0].mxu0
    %v445 = vadd.f32 %v361, %v444
    %v446 = vpop.f32.mrb[0].mxu0
    %447 = vdwg.mxu0
    %v448 = vmax.f32 %v430, 0.0
    %v449 = vmax.f32 %v435, 0.0
    %v450 = vmax.f32 %v440, 0.0
    %v451 = vmax.f32 %v445, 0.0
    %452 = vmatprep.subr.mxu0 0.0
    %453 = vmatpush1.msra.mxu0 %v448
    %454 = vmatprep.subr.mxu0 0.0
    %455 = vmatpush1.msra.mxu0 %v449
    %456 = vmatprep.subr.mxu0 0.0
    %457 = vmatpush1.msra.mxu0 %v450
    %458 = vmatprep.subr.mxu0 0.0
    %459 = vmatpush1.msra.mxu0 %v451
    %460 = vmatprep.subr.mxu0 0.0
    %461 = vmatpush1.msra.mxu0 0.0
    %462 = vmatprep.subr.mxu0 0.0
    %463 = vmatpush1.msra.mxu0 0.0
    %464 = vmatprep.subr.mxu0 0.0
    %465 = vmatpush1.msra.mxu0 0.0
    %466 = vmatprep.subr.mxu0 0.0
    %467 = vmatpush1.msra.mxu0 0.0
    %468 = vmatprep.subr.mxu0 0.0
    %469 = vmatpush1.msra.mxu0 0.0
    %470 = vmatprep.subr.mxu0 0.0
    %471 = vmatpush1.msra.mxu0 0.0
    %472 = vmatprep.subr.mxu0 0.0
    %473 = vmatpush1.msra.mxu0 0.0
    %474 = vmatprep.subr.mxu0 0.0
    %475 = vmatpush1.msra.mxu0 0.0
    %476 = vmatprep.subr.mxu0 0.0
    %477 = vmatpush1.msra.mxu0 0.0
    %478 = vmatprep.subr.mxu0 0.0
    %479 = vmatpush1.msra.mxu0 0.0
    %480 = vmatprep.subr.mxu0 0.0
    %481 = vmatpush1.msra.mxu0 0.0
    %482 = vmatprep.subr.mxu0 0.0
    %483 = vmatpush1.msra.mxu0 0.0
    %484 = vmatprep.subr.mxu0 0.0
    %485 = vmatpush1.msra.mxu0 0.0
    %486 = vmatprep.subr.mxu0 0.0
    %487 = vmatpush1.msra.mxu0 0.0
    %488 = vmatprep.subr.mxu0 0.0
    %489 = vmatpush1.msra.mxu0 0.0
    %490 = vmatprep.subr.mxu0 0.0
    %491 = vmatpush1.msra.mxu0 0.0
    %492 = vmatprep.subr.mxu0 0.0
    %493 = vmatpush1.msra.mxu0 0.0
    %494 = vmatprep.subr.mxu0 0.0
    %495 = vmatpush1.msra.mxu0 0.0
    %496 = vmatprep.subr.mxu0 0.0
    %497 = vmatpush1.msra.mxu0 0.0
    %498 = vmatprep.subr.mxu0 0.0
    %499 = vmatpush1.msra.mxu0 0.0
    %500 = vmatprep.subr.mxu0 0.0
    %501 = vmatpush1.msra.mxu0 0.0
    %502 = vmatprep.subr.mxu0 0.0
    %503 = vmatpush1.msra.mxu0 0.0
    %504 = vmatprep.subr.mxu0 0.0
    %505 = vmatpush1.msra.mxu0 0.0
    %506 = vmatprep.subr.mxu0 0.0
    %507 = vmatpush1.msra.mxu0 0.0
    %508 = vmatprep.subr.mxu0 0.0
    %509 = vmatpush1.msra.mxu0 0.0
    %510 = vmatprep.subr.mxu0 0.0
    %511 = vmatpush1.msra.mxu0 0.0
    %512 = vmatprep.subr.mxu0 0.0
    %513 = vmatpush1.msra.mxu0 0.0
    %514 = vmatprep.subr.mxu0 0.0
    %515 = vmatpush1.msra.mxu0 0.0
    %516 = vmatprep.mubr.f32.mxu0 0.0
    %517 = vmatmul.mubr.f32.gmra.mrb[0].mxu0 %v135
    %v518 = vpop.f32.mrb[0].mxu0
    %v519 = vadd.f32 0.0, %v518
    %v520 = vpop.f32.mrb[0].mxu0
    %521 = vmatprep.mubr.f32.mxu0 0.0
    %522 = vmatmul.mubr.f32.gmra.mrb[0].mxu0 %v138
    %v523 = vpop.f32.mrb[0].mxu0
    %v524 = vadd.f32 0.0, %v523
    %v525 = vpop.f32.mrb[0].mxu0
    %526 = vmatprep.mubr.f32.mxu0 0.0
    %527 = vmatmul.mubr.f32.gmra.mrb[0].mxu0 %v141
    %v528 = vpop.f32.mrb[0].mxu0
    %v529 = vadd.f32 0.0, %v528
    %v530 = vpop.f32.mrb[0].mxu0
    %531 = vmatprep.mubr.f32.mxu0 0.0
    %532 = vmatmul.mubr.f32.gmra.mrb[0].mxu0 %v144
    %v533 = vpop.f32.mrb[0].mxu0
    %v534 = vadd.f32 0.0, %v533
    %v535 = vpop.f32.mrb[0].mxu0
    %536 = vdwg.mxu0
    %v537 = vld [vmem:[#allocation6] sm:$0xff]
    %v538 = vld [vmem:[#allocation6 + $0x8] sm:$0xff]
    %v539 = vld [vmem:[#allocation6 + $0x10] sm:$0xff]
    %v540 = vld [vmem:[#allocation6 + $0x18] sm:$0xff]
    %v541 = vld [vmem:[#allocation6 + $0x20] sm:$0xff]
    %v542 = vld [vmem:[#allocation6 + $0x28] sm:$0xff]
    %v543 = vld [vmem:[#allocation6 + $0x30] sm:$0xff]
    %v544 = vld [vmem:[#allocation6 + $0x38] sm:$0xff]
    %v545 = vld [vmem:[#allocation6 + $0x40] sm:$0xff]
    %v546 = vld [vmem:[#allocation6 + $0x48] sm:$0xff]
    %v547 = vld [vmem:[#allocation6 + $0x50] sm:$0xff]
    %v548 = vld [vmem:[#allocation6 + $0x58] sm:$0xff]
    %v549 = vld [vmem:[#allocation6 + $0x60] sm:$0xff]
    %v550 = vld [vmem:[#allocation6 + $0x68] sm:$0xff]
    %v551 = vld [vmem:[#allocation6 + $0x70] sm:$0xff]
    %v552 = vld [vmem:[#allocation6 + $0x78] sm:$0xff]
    %v553 = vld [vmem:[#allocation6 + $0x80] sm:$0xff]
    %v554 = vld [vmem:[#allocation6 + $0x88] sm:$0xff]
    %v555 = vld [vmem:[#allocation6 + $0x90] sm:$0xff]
    %v556 = vld [vmem:[#allocation6 + $0x98] sm:$0xff]
    %v557 = vld [vmem:[#allocation6 + $0xa0] sm:$0xff]
    %v558 = vld [vmem:[#allocation6 + $0xa8] sm:$0xff]
    %v559 = vld [vmem:[#allocation6 + $0xb0] sm:$0xff]
    %v560 = vld [vmem:[#allocation6 + $0xb8] sm:$0xff]
    %v561 = vld [vmem:[#allocation6 + $0xc0] sm:$0xff]
    %v562 = vld [vmem:[#allocation6 + $0xc8] sm:$0xff]
    %v563 = vld [vmem:[#allocation6 + $0xd0] sm:$0xff]
    %v564 = vld [vmem:[#allocation6 + $0xd8] sm:$0xff]
    %v565 = vld [vmem:[#allocation6 + $0xe0] sm:$0xff]
    %v566 = vld [vmem:[#allocation6 + $0xe8] sm:$0xff]
    %v567 = vld [vmem:[#allocation6 + $0xf0] sm:$0xff]
    %v568 = vld [vmem:[#allocation6 + $0xf8] sm:$0xff]
    %v569 = vld [vmem:[%s9] sm:$0x1]
    %v571 = vlaneseq
    %v572 = vshrl.u32 %v571, 7
    %v573 = vsub.s32 0, %v572
    %v574 = vrot.slane %v569, %v573
    %576 = vmatprep.subr.mxu0 0.0
    %577 = vmatpush1.msra.mxu0 %v537
    %578 = vmatprep.subr.mxu0 0.0
    %579 = vmatpush1.msra.mxu0 %v538
    %580 = vmatprep.subr.mxu0 0.0
    %581 = vmatpush1.msra.mxu0 %v539
    %582 = vmatprep.subr.mxu0 0.0
    %583 = vmatpush1.msra.mxu0 %v540
    %584 = vmatprep.subr.mxu0 0.0
    %585 = vmatpush1.msra.mxu0 %v541
    %586 = vmatprep.subr.mxu0 0.0
    %587 = vmatpush1.msra.mxu0 %v542
    %588 = vmatprep.subr.mxu0 0.0
    %589 = vmatpush1.msra.mxu0 %v543
    %590 = vmatprep.subr.mxu0 0.0
    %591 = vmatpush1.msra.mxu0 %v544
    %592 = vmatprep.subr.mxu0 0.0
    %593 = vmatpush1.msra.mxu0 %v545
    %594 = vmatprep.subr.mxu0 0.0
    %595 = vmatpush1.msra.mxu0 %v546
    %596 = vmatprep.subr.mxu0 0.0
    %597 = vmatpush1.msra.mxu0 %v547
    %598 = vmatprep.subr.mxu0 0.0
    %599 = vmatpush1.msra.mxu0 %v548
    %600 = vmatprep.subr.mxu0 0.0
    %601 = vmatpush1.msra.mxu0 %v549
    %602 = vmatprep.subr.mxu0 0.0
    %603 = vmatpush1.msra.mxu0 %v550
    %604 = vmatprep.subr.mxu0 0.0
    %605 = vmatpush1.msra.mxu0 %v551
    %606 = vmatprep.subr.mxu0 0.0
    %607 = vmatpush1.msra.mxu0 %v552
    %608 = vmatprep.subr.mxu0 0.0
    %609 = vmatpush1.msra.mxu0 %v553
    %610 = vmatprep.subr.mxu0 0.0
    %611 = vmatpush1.msra.mxu0 %v554
    %612 = vmatprep.subr.mxu0 0.0
    %613 = vmatpush1.msra.mxu0 %v555
    %614 = vmatprep.subr.mxu0 0.0
    %615 = vmatpush1.msra.mxu0 %v556
    %616 = vmatprep.subr.mxu0 0.0
    %617 = vmatpush1.msra.mxu0 %v557
    %618 = vmatprep.subr.mxu0 0.0
    %619 = vmatpush1.msra.mxu0 %v558
    %620 = vmatprep.subr.mxu0 0.0
    %621 = vmatpush1.msra.mxu0 %v559
    %622 = vmatprep.subr.mxu0 0.0
    %623 = vmatpush1.msra.mxu0 %v560
    %624 = vmatprep.subr.mxu0 0.0
    %625 = vmatpush1.msra.mxu0 %v561
    %626 = vmatprep.subr.mxu0 0.0
    %627 = vmatpush1.msra.mxu0 %v562
    %628 = vmatprep.subr.mxu0 0.0
    %629 = vmatpush1.msra.mxu0 %v563
    %630 = vmatprep.subr.mxu0 0.0
    %631 = vmatpush1.msra.mxu0 %v564
    %632 = vmatprep.subr.mxu0 0.0
    %633 = vmatpush1.msra.mxu0 %v565
    %634 = vmatprep.subr.mxu0 0.0
    %635 = vmatpush1.msra.mxu0 %v566
    %636 = vmatprep.subr.mxu0 0.0
    %637 = vmatpush1.msra.mxu0 %v567
    %638 = vmatprep.subr.mxu0 0.0
    %639 = vmatpush1.msra.mxu0 %v568
    %640 = vmatprep.mubr.f32.mxu0 %v448
    %641 = vmatmul.mubr.f32.gmra.mrb[0].mxu0 %v519
    %v642 = vpop.f32.mrb[0].mxu0
    %v643 = vadd.f32 %v574, %v642
    %v644 = vpop.f32.mrb[0].mxu0
    %645 = vmatprep.mubr.f32.mxu0 %v449
    %646 = vmatmul.mubr.f32.gmra.mrb[0].mxu0 %v524
    %v647 = vpop.f32.mrb[0].mxu0
    %v648 = vadd.f32 %v574, %v647
    %v649 = vpop.f32.mrb[0].mxu0
    %650 = vmatprep.mubr.f32.mxu0 %v450
    %651 = vmatmul.mubr.f32.gmra.mrb[0].mxu0 %v529
    %v652 = vpop.f32.mrb[0].mxu0
    %v653 = vadd.f32 %v574, %v652
    %v654 = vpop.f32.mrb[0].mxu0
    %655 = vmatprep.mubr.f32.mxu0 %v451
    %656 = vmatmul.mubr.f32.gmra.mrb[0].mxu0 %v534
    %v657 = vpop.f32.mrb[0].mxu0
    %v658 = vadd.f32 %v574, %v657
    %v659 = vpop.f32.mrb[0].mxu0
    %660 = vdwg.mxu0
    %v661 = vmax.f32 %v643, 0.0
    %v662 = vmax.f32 %v648, 0.0
    %v663 = vmax.f32 %v653, 0.0
    %v664 = vmax.f32 %v658, 0.0
    %v665 = vld [vmem:[%s10] sm:$0x1]
    %v666 = vld [vmem:[#allocation2] sm:$0x1]
    %668 = vset.pattern.permute.xlu0 0
    %669 = vperm.xlu0 %668, %v666
    %v670 = vpop.permute.xlu0 %669
    %v672 = vlaneseq
    %v673 = vshrl.u32 %v672, 7
    %v674 = vsub.s32 0, %v673
    %v675 = vrot.slane %v670, %v674
    %676 = vmatprep.subr.mxu0 0.0
    %677 = vmatpush1.xpose.msra.mxu0 %v661
    %678 = vmatprep.subr.mxu0 0.0
    %679 = vmatpush1.xpose.msra.mxu0 %v662
    %680 = vmatprep.subr.mxu0 0.0
    %681 = vmatpush1.xpose.msra.mxu0 %v663
    %682 = vmatprep.subr.mxu0 0.0
    %683 = vmatpush1.xpose.msra.mxu0 %v664
    %684 = vmatprep.subr.mxu0 0.0
    %685 = vmatpush1.xpose.msra.mxu0 0.0
    %686 = vmatprep.subr.mxu0 0.0
    %687 = vmatpush1.xpose.msra.mxu0 0.0
    %688 = vmatprep.subr.mxu0 0.0
    %689 = vmatpush1.xpose.msra.mxu0 0.0
    %690 = vmatprep.subr.mxu0 0.0
    %691 = vmatpush1.xpose.msra.mxu0 0.0
    %692 = vmatprep.subr.mxu0 0.0
    %693 = vmatpush1.xpose.msra.mxu0 0.0
    %694 = vmatprep.subr.mxu0 0.0
    %695 = vmatpush1.xpose.msra.mxu0 0.0
    %696 = vmatprep.subr.mxu0 0.0
    %697 = vmatpush1.xpose.msra.mxu0 0.0
    %698 = vmatprep.subr.mxu0 0.0
    %699 = vmatpush1.xpose.msra.mxu0 0.0
    %700 = vmatprep.subr.mxu0 0.0
    %701 = vmatpush1.xpose.msra.mxu0 0.0
    %702 = vmatprep.subr.mxu0 0.0
    %703 = vmatpush1.xpose.msra.mxu0 0.0
    %704 = vmatprep.subr.mxu0 0.0
    %705 = vmatpush1.xpose.msra.mxu0 0.0
    %706 = vmatprep.subr.mxu0 0.0
    %707 = vmatpush1.xpose.msra.mxu0 0.0
    %708 = vmatprep.subr.mxu0 0.0
    %709 = vmatpush1.xpose.msra.mxu0 0.0
    %710 = vmatprep.subr.mxu0 0.0
    %711 = vmatpush1.xpose.msra.mxu0 0.0
    %712 = vmatprep.subr.mxu0 0.0
    %713 = vmatpush1.xpose.msra.mxu0 0.0
    %714 = vmatprep.subr.mxu0 0.0
    %715 = vmatpush1.xpose.msra.mxu0 0.0
    %716 = vmatprep.subr.mxu0 0.0
    %717 = vmatpush1.xpose.msra.mxu0 0.0
    %718 = vmatprep.subr.mxu0 0.0
    %719 = vmatpush1.xpose.msra.mxu0 0.0
    %720 = vmatprep.subr.mxu0 0.0
    %721 = vmatpush1.xpose.msra.mxu0 0.0
    %722 = vmatprep.subr.mxu0 0.0
    %723 = vmatpush1.xpose.msra.mxu0 0.0
    %724 = vmatprep.subr.mxu0 0.0
    %725 = vmatpush1.xpose.msra.mxu0 0.0
    %726 = vmatprep.subr.mxu0 0.0
    %727 = vmatpush1.xpose.msra.mxu0 0.0
    %728 = vmatprep.subr.mxu0 0.0
    %729 = vmatpush1.xpose.msra.mxu0 0.0
    %730 = vmatprep.subr.mxu0 0.0
    %731 = vmatpush1.xpose.msra.mxu0 0.0
    %732 = vmatprep.subr.mxu0 0.0
    %733 = vmatpush1.xpose.msra.mxu0 0.0
    %734 = vmatprep.subr.mxu0 0.0
    %735 = vmatpush1.xpose.msra.mxu0 0.0
    %736 = vmatprep.subr.mxu0 0.0
    %737 = vmatpush1.xpose.msra.mxu0 0.0
    %738 = vmatprep.subr.mxu0 0.0
    %739 = vmatpush1.xpose.msra.mxu0 0.0
    %740 = vmatprep.mubr.f32.mxu0 0.0
    %741 = vmatmul.mubr.f32.gmra.mrb[0].mxu0 %v665
    %v742 = vpop.f32.mrb[0].mxu0
    %v743 = vadd.f32 %v675, %v742
    %v744 = vpop.f32.mrb[0].mxu0
    %745 = vdwg.mxu0
    %v746 = vxor.u32 %v743, 2147483648
    %v747 = vmul.f32 %v746, 1.442695
    %v748 = vpow.pop %v747
    %v749 = vadd.f32 %v748, 1.0
    %v750 = vrcp.pop %v749
    %v751 = vmul.f32 1.0, %v750
    %v752 = vmul.f32 %v751, 0.8
    %v753 = vadd.f32 %v752, 0.1
    %vm754 = vcmp.lt.f32.partialorder %v83, %v753
    %v755 = vsel %vm754, 1, 0
    %v756 = vcvt.s32.f32 %v755
    %vm757 = vcmask 253952
    %758 = vst.msk [vmem:[#allocation8] sm:$0x1] %vm757, %v756
    %759 = vst.msk [vmem:[#allocation9] sm:$0x1] %vm757, %v753
    // Predicated region
    $region58: #{tpu_custom_call.1} parent=1 // pred_check
      _
    $region59: #{tpu_custom_call.1} parent=1 // pred_check_branch
      %761 = sbr.rel (0) target = $region61
    $region60: #{tpu_custom_call.1} parent=1 // pred_region
      %s763 = ssub.s32 16, 16
      %764 = vsyncadd [#allocation5], %s763
      %s766 = sshll.u32 [#allocation8], 4
      %s767 = int_to_ptr.vmem [resolvable:$true] %s766
      %769 = dma.vmem_to_hbm [thread:$0]  %s767, 16, %s12, [#allocation5]
    $region61: #{tpu_custom_call.1} parent=1 // pred_fallthru
      _
    // Predicated region
    $region62: #{tpu_custom_call.1} parent=1 // pred_check
      _
    $region63: #{tpu_custom_call.1} parent=1 // pred_check_branch
      %771 = sbr.rel (0) target = $region65
    $region64: #{tpu_custom_call.1} parent=1 // pred_region
      %s773 = ssub.s32 16, 16
      %774 = vsyncadd [#allocation10], %s773
      %s776 = sshll.u32 [#allocation9], 4
      %s777 = int_to_ptr.vmem [resolvable:$true] %s776
      %779 = dma.vmem_to_hbm [thread:$0]  %s777, 16, %s13, [#allocation10]
    $region65: #{tpu_custom_call.1} parent=1 // pred_fallthru
      _
    // Predicated region
    $region66: #{tpu_custom_call.1} parent=1 // pred_check
      _
    $region67: #{tpu_custom_call.1} parent=1 // pred_check_branch
      %781 = sbr.rel (0) target = $region69
    $region68: #{tpu_custom_call.1} parent=1 // pred_region
      %782 = dma.done [#allocation5], 16
    $region69: #{tpu_custom_call.1} parent=1 // pred_fallthru
      _
    // Predicated region
    $region70: #{tpu_custom_call.1} parent=1 // pred_check
      _
    $region71: #{tpu_custom_call.1} parent=1 // pred_check_branch
      %784 = sbr.rel (0) target = $region73
    $region72: #{tpu_custom_call.1} parent=1 // pred_region
      %785 = dma.done [#allocation10], 16
    $region73: #{tpu_custom_call.1} parent=1 // pred_fallthru
      _
    %786 = vsyncpa [#allocation4], 1
    %787 = vsyncpa [#allocation7], 1
    %788 = vsyncpa [#allocation5], 1
    %789 = vsyncpa [#allocation10], 1

</llo_original>
